<compile_context>
chip_gen: v6e
topology: v6e:2x2x1
jax: 0.10.0
libtpu: 0.0.40
codegen_flags: <defaults>
</compile_context>

<pallas_src>
import numpy as np
import jax
import jax.numpy as jnp
from jax.experimental import pallas as pl
from jax.experimental.pallas import tpu as pltpu

WIN = 11
PAD = WIN // 2
SIGMA = 1.5
C1 = 0.01 ** 2
C2 = 0.03 ** 2

# Gaussian window coefficients (same formula as the basicgs create_window:
# exp(-(x-5)^2/(2*sigma^2)), normalized), kept in float64.
_g = np.exp(-((np.arange(WIN) - WIN // 2) ** 2) / (2.0 * SIGMA ** 2))
GAUSS = (_g / _g.sum()).astype(np.float64)


def _band_matrix(n):
    """(n, n) float64 band matrix B with B[i, j] = g[j - i + PAD] inside the band.

    Left-multiplying (B @ x) blurs along rows, right-multiplying (x @ B) blurs
    along columns (B is symmetric); out-of-range taps are simply absent, which
    exactly reproduces the zero 'same' padding of the depthwise convolution.
    """
    m = np.zeros((n, n), np.float64)
    for i in range(n):
        for k in range(WIN):
            j = i + k - PAD
            if 0 <= j < n:
                m[i, j] = GAUSS[k]
    return m


def _bf16_values(a):
    """Round a float64 numpy array to the nearest bf16-representable values."""
    rounded = jnp.asarray(np.asarray(a, np.float32)).astype(jnp.bfloat16)
    return np.asarray(rounded.astype(jnp.float32)).astype(np.float64)


def _make_ssim_kernel(CH, W, pr):
    f32 = jnp.float32
    bf16 = jnp.bfloat16

    def kernel(gw_ref, gh_ref, corr_ref, pred_ref, targ_ref, out_ref):
        gw = gw_ref[...]        # (W, W)   bf16  column (W-axis) blur band matrix
        gh = gh_ref[...]        # (CH, CH) bf16  I_C (x) Gh row (H-axis) band matrix
        corr = corr_ref[...]    # (CH, W)  f32   exact DC-gain correction

        # Clip pred to max 1 (matches pred.clip(None, 1)); all math in f32.
        x = jnp.minimum(pred_ref[...].astype(f32), 1.0)    # (CH, W)
        y = targ_ref[...].astype(f32)                      # (CH, W)

        # Five blur operands for every channel, stacked on the sublane axis and
        # cast to bf16 so the MXU runs at its bf16 rate (f32 accumulate below).
        planes = jnp.concatenate(
            [x.astype(bf16), y.astype(bf16),
             (x * x).astype(bf16), (y * y).astype(bf16),
             (x * y).astype(bf16)],
            axis=0)                                        # (5*CH, W) bf16

        # Pass 1 (W axis): ONE MXU matmul for all 5 planes * all channels.
        t = jnp.dot(planes, gw, preferred_element_type=f32)   # (5*CH, W) f32

        # Pass 2 (H axis): block-diagonal Gh keeps channels separate, so the
        # channel fold rides along; 5 matmuls with gh held resident.  `corr`
        # removes the bf16 weight-rounding DC gain of both passes exactly.
        blurred = []
        for p in range(5):
            tp = t[p * CH:(p + 1) * CH, :].astype(bf16)
            blurred.append(jnp.dot(gh, tp, preferred_element_type=f32) * corr)
        mu1, mu2, bxx, byy, bxy = blurred

        mu1_sq = mu1 * mu1
        mu2_sq = mu2 * mu2
        mu1_mu2 = mu1 * mu2
        sigma1_sq = bxx - mu1_sq
        sigma2_sq = byy - mu2_sq
        sigma12 = bxy - mu1_mu2

        num = (2.0 * mu1_mu2 + C1) * (2.0 * sigma12 + C2)
        den = (mu1_sq + mu2_sq + C1) * (sigma1_sq + sigma2_sq + C2)
        one_minus = 1.0 - num / den                        # (CH, W) f32

        # Deferred reduction: VPU-only partial sums down to (pr, W); the final
        # cross-lane / cross-sublane collapse is done by the wrapper (XLA).
        if pr > 1:
            out_ref[...] = one_minus.reshape(CH // pr, pr, W).sum(axis=0)
        else:
            out_ref[...] = one_minus.sum(axis=0, keepdims=True)

    return kernel


def ssim_loss_pallas(pred, target, loss_weight=1.0, reduction='mean', weight=None):
    """pred/target: (N, C, H, W) NCHW (any float dtype). Returns scalar loss."""
    assert pred.shape == target.shape
    if weight is not None:
        # TODO(synk): element-wise `weight` needs the full (N,C,H,W) loss map.
        raise NotImplementedError("element-wise weight not supported in this kernel")
    if reduction not in ('mean', 'sum'):
        # TODO(synk): reduction='none' needs the full (N,C,H,W) map as output;
        # this partial-sum kernel only supports 'mean'/'sum'.
        raise NotImplementedError("reduction='none' not supported in this kernel")

    N, C, H, W = pred.shape
    CH = C * H
    pr = 8 if CH % 8 == 0 else 1   # rows kept in the per-image partial sum

    # Band matrices (float64), their bf16-rounded values, and the exact DC-gain
    # correction (exact rowsum / bf16 rowsum, per output row x output column).
    gh64 = _band_matrix(H)
    gw64 = _band_matrix(W)
    gh_bf = _bf16_values(gh64)
    gw_bf = _bf16_values(gw64)
    row_gain = gh_bf.sum(axis=1) / gh64.sum(axis=1)       # (H,)  pass-2 gain
    col_gain = gw_bf.sum(axis=0) / gw64.sum(axis=0)       # (W,)  pass-1 gain
    corr = np.tile(1.0 / np.outer(row_gain, col_gain), (C, 1)).astype(np.float32)
    biggh = np.kron(np.eye(C), gh_bf)                     # (C*H, C*H) block-diag

    gw_dev = jnp.asarray(gw_bf, jnp.bfloat16)
    gh_dev = jnp.asarray(biggh, jnp.bfloat16)
    corr_dev = jnp.asarray(corr, jnp.float32)

    # (N, C, H, W) -> (N, C*H, W): channels fold into the matmul M dimension
    # (bitwise-identical row-major layout, so this reshape is free in HBM).
    pred2 = pred.reshape(N, CH, W)
    targ2 = target.reshape(N, CH, W)

    flops = N * (2 * 5 * CH * W * W + 2 * 5 * CH * CH * W + 45 * CH * W)
    bytes_accessed = (2 * N * CH * W * pred.dtype.itemsize
                      + (W * W + CH * CH) * 2 + CH * W * 4 + N * pr * W * 4)

    partial = pl.pallas_call(
        _make_ssim_kernel(CH, W, pr),
        out_shape=jax.ShapeDtypeStruct((N, pr, W), jnp.float32),
        grid_spec=pltpu.PrefetchScalarGridSpec(
            num_scalar_prefetch=0,
            grid=(N,),
            in_specs=[
                pl.BlockSpec((W, W), lambda n: (0, 0)),       # gw (constant)
                pl.BlockSpec((CH, CH), lambda n: (0, 0)),     # I_C (x) gh (constant)
                pl.BlockSpec((CH, W), lambda n: (0, 0)),      # gain correction
                pl.BlockSpec((None, CH, W), lambda n: (n, 0, 0)),   # pred
                pl.BlockSpec((None, CH, W), lambda n: (n, 0, 0)),   # target
            ],
            out_specs=pl.BlockSpec((None, pr, W), lambda n: (n, 0, 0)),
        ),
        compiler_params=pltpu.CompilerParams(
            dimension_semantics=("parallel",)),
        cost_estimate=pl.CostEstimate(
            flops=flops, transcendentals=N * CH * W,
            bytes_accessed=bytes_accessed),
    )(gw_dev, gh_dev, corr_dev, pred2, targ2)

    s = jnp.sum(partial)
    if reduction == 'mean':
        l = s / (N * C * H * W)
    else:
        l = s
    return loss_weight * l


def ssim_loss_ref(pred, target, loss_weight=1.0):
    """Pure-JAX reference (depthwise conv2d, zero 'same' padding, f32 HIGHEST)."""
    pred = jnp.minimum(pred.astype(jnp.float32), 1.0)
    target = target.astype(jnp.float32)
    N, C, H, W = pred.shape
    g1 = jnp.asarray(GAUSS, jnp.float32)
    w2d = jnp.outer(g1, g1)
    window = jnp.broadcast_to(w2d, (C, 1, WIN, WIN))

    def conv(x):
        return jax.lax.conv_general_dilated(
            x, window, window_strides=(1, 1), padding=((PAD, PAD), (PAD, PAD)),
            feature_group_count=C, dimension_numbers=('NCHW', 'OIHW', 'NCHW'),
            precision=jax.lax.Precision.HIGHEST)

    mu1, mu2 = conv(pred), conv(target)
    mu1_sq, mu2_sq, mu1_mu2 = mu1 * mu1, mu2 * mu2, mu1 * mu2
    sigma1_sq = conv(pred * pred) - mu1_sq
    sigma2_sq = conv(target * target) - mu2_sq
    sigma12 = conv(pred * target) - mu1_mu2
    ssim_map = ((2 * mu1_mu2 + C1) * (2 * sigma12 + C2)) / (
        (mu1_sq + mu2_sq + C1) * (sigma1_sq + sigma2_sq + C2))
    return loss_weight * jnp.mean(1.0 - ssim_map)


if __name__ == "__main__":
    key = jax.random.PRNGKey(0)
    k1, k2 = jax.random.split(key)
    N, C, H, W = 2, 4, 16, 16
    pred = jax.random.uniform(k1, (N, C, H, W), jnp.float32, 0.0, 1.2)  # >1 exercises clip
    target = jax.random.uniform(k2, (N, C, H, W), jnp.float32, 0.0, 1.0)

    loss = ssim_loss_pallas(pred, target, loss_weight=1.0, reduction='mean')
    loss = jax.block_until_ready(loss)

    ref = jax.block_until_ready(ssim_loss_ref(pred, target, loss_weight=1.0))
    # bf16 MXU inputs (with the exact DC-gain correction) leave only unbiased
    # rounding noise (~1e-3); 5e-3 still catches padding/window/clip mistakes.
    np.testing.assert_allclose(np.asarray(loss), np.asarray(ref), rtol=5e-3, atol=5e-3)

    print("KERNEL_OK")
</pallas_src>

<mosaic_0001>
module attributes {stable_mosaic.version = 11 : i64} {
  func.func @kernel(%arg0: i32, %arg1: memref<16x16xbf16, #tpu.memory_space<vmem>>, %arg2: memref<64x64xbf16, #tpu.memory_space<vmem>>, %arg3: memref<64x16xf32, #tpu.memory_space<vmem>>, %arg4: memref<1x64x16xf32, #tpu.memory_space<vmem>>, %arg5: memref<1x64x16xf32, #tpu.memory_space<vmem>>, %arg6: memref<1x8x16xf32, #tpu.memory_space<vmem>>) attributes {dimension_semantics = [#tpu.dimension_semantics<parallel>], iteration_bounds = array<i64: 2>, scalar_prefetch = 0 : i64, scratch_operands = 0 : i64, tpu.core_type = #tpu.core_type<tc>, window_params = [{pipeline_mode = #tpu.pipeline_mode<synchronous>, transform_indices = @transform_0, window_bounds = array<i64: 16, 16>}, {pipeline_mode = #tpu.pipeline_mode<synchronous>, transform_indices = @transform_1, window_bounds = array<i64: 64, 64>}, {pipeline_mode = #tpu.pipeline_mode<synchronous>, transform_indices = @transform_2, window_bounds = array<i64: 64, 16>}, {transform_indices = @transform_3, window_bounds = array<i64: 1, 64, 16>}, {transform_indices = @transform_4, window_bounds = array<i64: 1, 64, 16>}, {transform_indices = @transform_5, window_bounds = array<i64: 1, 8, 16>}]} {
    %c0 = arith.constant 0 : index
    %c0_0 = arith.constant 0 : index
    %0 = vector.load %arg1[%c0, %c0_0] : memref<16x16xbf16, #tpu.memory_space<vmem>>, vector<16x16xbf16>
    %c0_1 = arith.constant 0 : index
    %c0_2 = arith.constant 0 : index
    %1 = vector.load %arg2[%c0_1, %c0_2] : memref<64x64xbf16, #tpu.memory_space<vmem>>, vector<64x64xbf16>
    %c0_3 = arith.constant 0 : index
    %c0_4 = arith.constant 0 : index
    %2 = vector.load %arg3[%c0_3, %c0_4] : memref<64x16xf32, #tpu.memory_space<vmem>>, vector<64x16xf32>
    %c0_5 = arith.constant 0 : index
    %c0_6 = arith.constant 0 : index
    %c0_7 = arith.constant 0 : index
    %3 = vector.load %arg4[%c0_5, %c0_6, %c0_7] : memref<1x64x16xf32, #tpu.memory_space<vmem>>, vector<1x64x16xf32>
    %4 = vector.shape_cast %3 : vector<1x64x16xf32> to vector<64x16xf32>
    %cst = arith.constant 1.000000e+00 : f32
    %5 = vector.broadcast %cst : f32 to vector<64x16xf32>
    %6 = arith.minimumf %4, %5 : vector<64x16xf32>
    %c0_8 = arith.constant 0 : index
    %c0_9 = arith.constant 0 : index
    %c0_10 = arith.constant 0 : index
    %7 = vector.load %arg5[%c0_8, %c0_9, %c0_10] : memref<1x64x16xf32, #tpu.memory_space<vmem>>, vector<1x64x16xf32>
    %8 = vector.shape_cast %7 : vector<1x64x16xf32> to vector<64x16xf32>
    %9 = arith.truncf %6 : vector<64x16xf32> to vector<64x16xbf16>
    %10 = arith.truncf %8 : vector<64x16xf32> to vector<64x16xbf16>
    %11 = arith.mulf %6, %6 : vector<64x16xf32>
    %12 = arith.truncf %11 : vector<64x16xf32> to vector<64x16xbf16>
    %13 = arith.mulf %8, %8 : vector<64x16xf32>
    %14 = arith.truncf %13 : vector<64x16xf32> to vector<64x16xbf16>
    %15 = arith.mulf %6, %8 : vector<64x16xf32>
    %16 = arith.truncf %15 : vector<64x16xf32> to vector<64x16xbf16>
    %17 = tpu.concatenate %9, %10, %12, %14, %16 in 0 : vector<64x16xbf16>, vector<64x16xbf16>, vector<64x16xbf16>, vector<64x16xbf16>, vector<64x16xbf16> -> vector<320x16xbf16>
    %cst_11 = arith.constant dense<0.000000e+00> : vector<320x16xf32>
    %18 = tpu.matmul %17, %0, %cst_11 {dimension_numbers = #tpu.dot_dimension_numbers<[1], [0], [0], [1], [0, 0, 1, 1], [], []>} : vector<320x16xbf16>, vector<16x16xbf16>, vector<320x16xf32> -> vector<320x16xf32>
    %19 = vector.extract_strided_slice %18 {offsets = [0, 0], sizes = [64, 16], strides = [1, 1]} : vector<320x16xf32> to vector<64x16xf32>
    %20 = arith.truncf %19 : vector<64x16xf32> to vector<64x16xbf16>
    %cst_12 = arith.constant dense<0.000000e+00> : vector<64x16xf32>
    %21 = tpu.matmul %1, %20, %cst_12 {dimension_numbers = #tpu.dot_dimension_numbers<[1], [0], [0], [1], [0, 0, 1, 1], [], []>} : vector<64x64xbf16>, vector<64x16xbf16>, vector<64x16xf32> -> vector<64x16xf32>
    %22 = arith.mulf %21, %2 : vector<64x16xf32>
    %23 = vector.extract_strided_slice %18 {offsets = [64, 0], sizes = [64, 16], strides = [1, 1]} : vector<320x16xf32> to vector<64x16xf32>
    %24 = arith.truncf %23 : vector<64x16xf32> to vector<64x16xbf16>
    %cst_13 = arith.constant dense<0.000000e+00> : vector<64x16xf32>
    %25 = tpu.matmul %1, %24, %cst_13 {dimension_numbers = #tpu.dot_dimension_numbers<[1], [0], [0], [1], [0, 0, 1, 1], [], []>} : vector<64x64xbf16>, vector<64x16xbf16>, vector<64x16xf32> -> vector<64x16xf32>
    %26 = arith.mulf %25, %2 : vector<64x16xf32>
    %27 = vector.extract_strided_slice %18 {offsets = [128, 0], sizes = [64, 16], strides = [1, 1]} : vector<320x16xf32> to vector<64x16xf32>
    %28 = arith.truncf %27 : vector<64x16xf32> to vector<64x16xbf16>
    %cst_14 = arith.constant dense<0.000000e+00> : vector<64x16xf32>
    %29 = tpu.matmul %1, %28, %cst_14 {dimension_numbers = #tpu.dot_dimension_numbers<[1], [0], [0], [1], [0, 0, 1, 1], [], []>} : vector<64x64xbf16>, vector<64x16xbf16>, vector<64x16xf32> -> vector<64x16xf32>
    %30 = arith.mulf %29, %2 : vector<64x16xf32>
    %31 = vector.extract_strided_slice %18 {offsets = [192, 0], sizes = [64, 16], strides = [1, 1]} : vector<320x16xf32> to vector<64x16xf32>
    %32 = arith.truncf %31 : vector<64x16xf32> to vector<64x16xbf16>
    %cst_15 = arith.constant dense<0.000000e+00> : vector<64x16xf32>
    %33 = tpu.matmul %1, %32, %cst_15 {dimension_numbers = #tpu.dot_dimension_numbers<[1], [0], [0], [1], [0, 0, 1, 1], [], []>} : vector<64x64xbf16>, vector<64x16xbf16>, vector<64x16xf32> -> vector<64x16xf32>
    %34 = arith.mulf %33, %2 : vector<64x16xf32>
    %35 = vector.extract_strided_slice %18 {offsets = [256, 0], sizes = [64, 16], strides = [1, 1]} : vector<320x16xf32> to vector<64x16xf32>
    %36 = arith.truncf %35 : vector<64x16xf32> to vector<64x16xbf16>
    %cst_16 = arith.constant dense<0.000000e+00> : vector<64x16xf32>
    %37 = tpu.matmul %1, %36, %cst_16 {dimension_numbers = #tpu.dot_dimension_numbers<[1], [0], [0], [1], [0, 0, 1, 1], [], []>} : vector<64x64xbf16>, vector<64x16xbf16>, vector<64x16xf32> -> vector<64x16xf32>
    %38 = arith.mulf %37, %2 : vector<64x16xf32>
    %39 = arith.mulf %22, %22 : vector<64x16xf32>
    %40 = arith.mulf %26, %26 : vector<64x16xf32>
    %41 = arith.mulf %22, %26 : vector<64x16xf32>
    %42 = arith.subf %30, %39 : vector<64x16xf32>
    %43 = arith.subf %34, %40 : vector<64x16xf32>
    %44 = arith.subf %38, %41 : vector<64x16xf32>
    %cst_17 = arith.constant 2.000000e+00 : f32
    %45 = vector.broadcast %cst_17 : f32 to vector<64x16xf32>
    %46 = arith.mulf %45, %41 : vector<64x16xf32>
    %cst_18 = arith.constant 9.99999974E-5 : f32
    %47 = vector.broadcast %cst_18 : f32 to vector<64x16xf32>
    %48 = arith.addf %46, %47 : vector<64x16xf32>
    %cst_19 = arith.constant 2.000000e+00 : f32
    %49 = vector.broadcast %cst_19 : f32 to vector<64x16xf32>
    %50 = arith.mulf %49, %44 : vector<64x16xf32>
    %cst_20 = arith.constant 8.99999984E-4 : f32
    %51 = vector.broadcast %cst_20 : f32 to vector<64x16xf32>
    %52 = arith.addf %50, %51 : vector<64x16xf32>
    %53 = arith.mulf %48, %52 : vector<64x16xf32>
    %54 = arith.addf %39, %40 : vector<64x16xf32>
    %cst_21 = arith.constant 9.99999974E-5 : f32
    %55 = vector.broadcast %cst_21 : f32 to vector<64x16xf32>
    %56 = arith.addf %54, %55 : vector<64x16xf32>
    %57 = arith.addf %42, %43 : vector<64x16xf32>
    %cst_22 = arith.constant 8.99999984E-4 : f32
    %58 = vector.broadcast %cst_22 : f32 to vector<64x16xf32>
    %59 = arith.addf %57, %58 : vector<64x16xf32>
    %60 = arith.mulf %56, %59 : vector<64x16xf32>
    %61 = arith.divf %53, %60 : vector<64x16xf32>
    %cst_23 = arith.constant 1.000000e+00 : f32
    %62 = vector.broadcast %cst_23 : f32 to vector<64x16xf32>
    %63 = arith.subf %62, %61 : vector<64x16xf32>
    %64 = vector.shape_cast %63 : vector<64x16xf32> to vector<8x8x16xf32>
    %cst_24 = arith.constant dense<0.000000e+00> : vector<8x16xf32>
    %65 = vector.multi_reduction <add>, %64, %cst_24 [0] : vector<8x8x16xf32> to vector<8x16xf32>
    %c0_25 = arith.constant 0 : index
    %c0_26 = arith.constant 0 : index
    %c0_27 = arith.constant 0 : index
    %66 = vector.load %arg6[%c0_25, %c0_26, %c0_27] : memref<1x8x16xf32, #tpu.memory_space<vmem>>, vector<1x8x16xf32>
    %67 = vector.shape_cast %66 : vector<1x8x16xf32> to vector<8x16xf32>
    %68 = vector.shape_cast %65 : vector<8x16xf32> to vector<1x8x16xf32>
    tpu.vector_store %arg6[%c0_25, %c0_26, %c0_27], %68 {strides = array<i32>} : memref<1x8x16xf32, #tpu.memory_space<vmem>>, vector<1x8x16xf32>,
    return
  }
  func.func @transform_0(%arg0: i32) -> (i32, i32) {
    %c0_i32 = arith.constant 0 : i32
    %c0_i32_0 = arith.constant 0 : i32
    %c0_i32_1 = arith.constant 0 : i32
    return %c0_i32, %c0_i32_0 : i32, i32
  }
  func.func @transform_1(%arg0: i32) -> (i32, i32) {
    %c0_i32 = arith.constant 0 : i32
    %c0_i32_0 = arith.constant 0 : i32
    %c0_i32_1 = arith.constant 0 : i32
    return %c0_i32, %c0_i32_0 : i32, i32
  }
  func.func @transform_2(%arg0: i32) -> (i32, i32) {
    %c0_i32 = arith.constant 0 : i32
    %c0_i32_0 = arith.constant 0 : i32
    %c0_i32_1 = arith.constant 0 : i32
    return %c0_i32, %c0_i32_0 : i32, i32
  }
  func.func @transform_3(%arg0: i32) -> (i32, i32, i32) {
    %c0_i32 = arith.constant 0 : i32
    %c0_i32_0 = arith.constant 0 : i32
    %c0_i32_1 = arith.constant 0 : i32
    return %arg0, %c0_i32, %c0_i32_0 : i32, i32, i32
  }
  func.func @transform_4(%arg0: i32) -> (i32, i32, i32) {
    %c0_i32 = arith.constant 0 : i32
    %c0_i32_0 = arith.constant 0 : i32
    %c0_i32_1 = arith.constant 0 : i32
    return %arg0, %c0_i32, %c0_i32_0 : i32, i32, i32
  }
  func.func @transform_5(%arg0: i32) -> (i32, i32, i32) {
    %c0_i32 = arith.constant 0 : i32
    %c0_i32_0 = arith.constant 0 : i32
    %c0_i32_1 = arith.constant 0 : i32
    return %arg0, %c0_i32, %c0_i32_0 : i32, i32, i32
  }
}

</mosaic_0001>

<llo_original>
// kernel: tpu_custom_call.1
$region0: #{tpu_custom_call.1}
  #allocation0 [shape = 'u32[]', space=smem, size = 0x4, offset = 0x4, fixed_abs, tag = 'smem constant byte address 0x4 - core index']
  #allocation1 [shape = 'u32[144,128]{1,0:T(1,128)}', space=vmem, size = 0x12000, scoped, tag = 'internal scratch']
  %s0 = inlined_call_operand.vmem [shape: bf16[16,16], index: 0, kind: input, shape index: {}]
  %s1 = inlined_call_operand.vmem [shape: bf16[64,64], index: 1, kind: input, shape index: {}]
  %s2 = inlined_call_operand.vmem [shape: f32[64,16], index: 2, kind: input, shape index: {}]
  %s3 = inlined_call_operand.vmem [shape: f32[2,64,16], index: 3, kind: input, shape index: {}]
  %s4 = inlined_call_operand.vmem [shape: f32[2,64,16], index: 4, kind: input, shape index: {}]
  %s5 = inlined_call_operand.hbm [shape: f32[2,8,16], index: 5, kind: output, shape index: {}]
  %s6 = sld [smem:[#allocation0]]
  $region53: #{tpu_custom_call.1} parent=0
    _
  %s8 = ssub.s32 1, %s6
  %s9 = scalar_select 0, %s8, %s6
  $region1: #{tpu_custom_call.1} parent=0
    #allocation2 [shape = 'u8[8192]{0}', space=vmem, size = 0x2000, scoped, tag = 'output window, operand 0']
    #allocation3 [shape = 's32[2]{0}', space=sflag, size = 0x8, scoped, tag = 'scoped memory for tpu_custom_call.1']
    %10 = vsyncpa [#allocation3], 0
    %s11 = scalar_lea.sflag [#allocation3], 1
    %12 = vsyncpa %s11, 0
    loop: start=0, step=1, limit=4
    $region2: #{tpu_custom_call.1} parent=1 // loop_pre_header
      _
    $region3: #{tpu_custom_call.1} parent=1 // loop_header
      %s14 = sphi 0, %s18
      %p15 = scmp.ge.s32.totalorder %s14, 4
      %s22 = sphi 0, %s22
      %s24 = sphi 0, %s22
      %s25 = sphi 0, %s24
      %s39 = sphi 0, %s25
      %s43 = sphi 0, %s43
      %s45 = sphi 0, %s43
      %s46 = sphi 0, %s45
      %s60 = sphi 0, %s46
      %s64 = sphi 0, %s64
      %s66 = sphi 0, %s64
      %s67 = sphi 0, %s66
      %s81 = sphi 0, %s67
      %s87 = sphi 0, %s89
      %s90 = sphi 0, %s87
      %s91 = sphi 0, %s90
      %s107 = sphi 0, %s91
      %s113 = sphi 0, %s115
      %s116 = sphi 0, %s113
      %s117 = sphi 0, %s116
      %s133 = sphi 0, %s117
      %s139 = sphi 0, %s141
      %s142 = sphi 0, %s139
      %s143 = sphi 0, %s142
      %s159 = sphi 0, %s143
    $region4: #{tpu_custom_call.1} parent=1 // loop_header_branch
      %17 = sbr.rel (%p15) target = $region8
    $region5: #{tpu_custom_call.1} parent=1 // loop_body
      %s19 = ssub.s32 %s14, 1
      %s20 = ssub.s32 %s14, 2
      %s21 = sadd.s32 %s14, 1
      %s23 = sadd.s32 %s22, 1
      %p26 = scmp.eq.s32.totalorder %s14, 1
      %p27 = scmp.ne.s32.totalorder %s22, %s24
      %p28 = scmp.eq.s32.totalorder %s14, 0
      %p29 = por %p27, %p28
      %p30 = scmp.ne.s32.totalorder %s22, %s24
      %p31 = scmp.eq.s32.totalorder %s19, 1
      %p32 = por %p30, %p31
      %p33 = scmp.ne.s32.totalorder %s24, %s25
      %p34 = scmp.eq.s32.totalorder %s19, 0
      %p35 = por %p33, %p34
      %p36 = scmp.ne.s32.totalorder %s24, %s25
      %p37 = scmp.eq.s32.totalorder %s20, 1
      %p38 = por %p36, %p37
      %p40 = scmp.ne.s32.totalorder %s25, %s39
      %p41 = scmp.eq.s32.totalorder %s20, 0
      %p42 = por %p40, %p41
      %s44 = sadd.s32 %s43, 1
      %p47 = scmp.eq.s32.totalorder %s14, 1
      %p48 = scmp.ne.s32.totalorder %s43, %s45
      %p49 = scmp.eq.s32.totalorder %s14, 0
      %p50 = por %p48, %p49
      %p51 = scmp.ne.s32.totalorder %s43, %s45
      %p52 = scmp.eq.s32.totalorder %s19, 1
      %p53 = por %p51, %p52
      %p54 = scmp.ne.s32.totalorder %s45, %s46
      %p55 = scmp.eq.s32.totalorder %s19, 0
      %p56 = por %p54, %p55
      %p57 = scmp.ne.s32.totalorder %s45, %s46
      %p58 = scmp.eq.s32.totalorder %s20, 1
      %p59 = por %p57, %p58
      %p61 = scmp.ne.s32.totalorder %s46, %s60
      %p62 = scmp.eq.s32.totalorder %s20, 0
      %p63 = por %p61, %p62
      %s65 = sadd.s32 %s64, 1
      %p68 = scmp.eq.s32.totalorder %s14, 1
      %p69 = scmp.ne.s32.totalorder %s64, %s66
      %p70 = scmp.eq.s32.totalorder %s14, 0
      %p71 = por %p69, %p70
      %p72 = scmp.ne.s32.totalorder %s64, %s66
      %p73 = scmp.eq.s32.totalorder %s19, 1
      %p74 = por %p72, %p73
      %p75 = scmp.ne.s32.totalorder %s66, %s67
      %p76 = scmp.eq.s32.totalorder %s19, 0
      %p77 = por %p75, %p76
      %p78 = scmp.ne.s32.totalorder %s66, %s67
      %p79 = scmp.eq.s32.totalorder %s20, 1
      %p80 = por %p78, %p79
      %p82 = scmp.ne.s32.totalorder %s67, %s81
      %p83 = scmp.eq.s32.totalorder %s20, 0
      %p84 = por %p82, %p83
      %s85 = ssub.s32 %s14, %s21
      %p86 = scmp.eq.s32.totalorder %s85, 0
      %s88 = sadd.s32 %s87, 1
      %s89 = scalar_select %p86, %s87, %s88
      %p92 = pneg %p86
      %p93 = scmp.eq.s32.totalorder %s14, 1
      %p94 = por %p92, %p93
      %p95 = scmp.ne.s32.totalorder %s87, %s90
      %p96 = scmp.eq.s32.totalorder %s14, 0
      %p97 = por %p95, %p96
      %p98 = scmp.ne.s32.totalorder %s87, %s90
      %p99 = scmp.eq.s32.totalorder %s19, 1
      %p100 = por %p98, %p99
      %p101 = scmp.ne.s32.totalorder %s90, %s91
      %p102 = scmp.eq.s32.totalorder %s19, 0
      %p103 = por %p101, %p102
      %p104 = scmp.ne.s32.totalorder %s90, %s91
      %p105 = scmp.eq.s32.totalorder %s20, 1
      %p106 = por %p104, %p105
      %p108 = scmp.ne.s32.totalorder %s91, %s107
      %p109 = scmp.eq.s32.totalorder %s20, 0
      %p110 = por %p108, %p109
      %s111 = ssub.s32 %s14, %s21
      %p112 = scmp.eq.s32.totalorder %s111, 0
      %s114 = sadd.s32 %s113, 1
      %s115 = scalar_select %p112, %s113, %s114
      %p118 = pneg %p112
      %p119 = scmp.eq.s32.totalorder %s14, 1
      %p120 = por %p118, %p119
      %p121 = scmp.ne.s32.totalorder %s113, %s116
      %p122 = scmp.eq.s32.totalorder %s14, 0
      %p123 = por %p121, %p122
      %p124 = scmp.ne.s32.totalorder %s113, %s116
      %p125 = scmp.eq.s32.totalorder %s19, 1
      %p126 = por %p124, %p125
      %p127 = scmp.ne.s32.totalorder %s116, %s117
      %p128 = scmp.eq.s32.totalorder %s19, 0
      %p129 = por %p127, %p128
      %p130 = scmp.ne.s32.totalorder %s116, %s117
      %p131 = scmp.eq.s32.totalorder %s20, 1
      %p132 = por %p130, %p131
      %p134 = scmp.ne.s32.totalorder %s117, %s133
      %p135 = scmp.eq.s32.totalorder %s20, 0
      %p136 = por %p134, %p135
      %s137 = ssub.s32 %s14, %s21
      %p138 = scmp.eq.s32.totalorder %s137, 0
      %s140 = sadd.s32 %s139, 1
      %s141 = scalar_select %p138, %s139, %s140
      %p144 = pneg %p138
      %p145 = scmp.eq.s32.totalorder %s14, 1
      %p146 = por %p144, %p145
      %p147 = scmp.ne.s32.totalorder %s139, %s142
      %p148 = scmp.eq.s32.totalorder %s14, 0
      %p149 = por %p147, %p148
      %p150 = scmp.ne.s32.totalorder %s139, %s142
      %p151 = scmp.eq.s32.totalorder %s19, 1
      %p152 = por %p150, %p151
      %p153 = scmp.ne.s32.totalorder %s142, %s143
      %p154 = scmp.eq.s32.totalorder %s19, 0
      %p155 = por %p153, %p154
      %p156 = scmp.ne.s32.totalorder %s142, %s143
      %p157 = scmp.eq.s32.totalorder %s20, 1
      %p158 = por %p156, %p157
      %p160 = scmp.ne.s32.totalorder %s143, %s159
      %p161 = scmp.eq.s32.totalorder %s20, 0
      %p162 = por %p160, %p161
      %p163 = scmp.le.s32.totalorder 1, %s14
      %p164 = scmp.lt.s32.totalorder %s14, 3
      %p165 = pnand %p163, %p164
      %p166 = pneg %p165
      // Predicated region
      $region9: #{tpu_custom_call.1} parent=5 // pred_check
        _
      $region10: #{tpu_custom_call.1} parent=5 // pred_check_branch
        %168 = sbr.rel (%p165) target = $region12
      $region11: #{tpu_custom_call.1} parent=5 // pred_region
        %s169 = ssub.s32 %s14, 1
        // Predicated region
        $region13: #{tpu_custom_call.1} parent=11 // pred_check
          %p170 = pneg %p35
        $region14: #{tpu_custom_call.1} parent=11 // pred_check_branch
          %172 = sbr.rel (%p170) target = $region16
        $region15: #{tpu_custom_call.1} parent=11 // pred_region
          _
        $region16: #{tpu_custom_call.1} parent=11 // pred_fallthru
          _
        // Predicated region
        $region17: #{tpu_custom_call.1} parent=11 // pred_check
          %p173 = pneg %p56
        $region18: #{tpu_custom_call.1} parent=11 // pred_check_branch
          %175 = sbr.rel (%p173) target = $region20
        $region19: #{tpu_custom_call.1} parent=11 // pred_region
          _
        $region20: #{tpu_custom_call.1} parent=11 // pred_fallthru
          _
        // Predicated region
        $region21: #{tpu_custom_call.1} parent=11 // pred_check
          %p176 = pneg %p77
        $region22: #{tpu_custom_call.1} parent=11 // pred_check_branch
          %178 = sbr.rel (%p176) target = $region24
        $region23: #{tpu_custom_call.1} parent=11 // pred_region
          _
        $region24: #{tpu_custom_call.1} parent=11 // pred_fallthru
          _
      $region12: #{tpu_custom_call.1} parent=5 // pred_fallthru
        _
      %p179 = scmp.lt.s32.totalorder %s14, 2
      // Predicated region
      $region25: #{tpu_custom_call.1} parent=5 // pred_check
        %p180 = pneg %p179
      $region26: #{tpu_custom_call.1} parent=5 // pred_check_branch
        %182 = sbr.rel (%p180) target = $region28
      $region27: #{tpu_custom_call.1} parent=5 // pred_region
        // Predicated region
        $region29: #{tpu_custom_call.1} parent=27 // pred_check
          %p183 = pneg %p97
        $region30: #{tpu_custom_call.1} parent=27 // pred_check_branch
          %185 = sbr.rel (%p183) target = $region32
        $region31: #{tpu_custom_call.1} parent=27 // pred_region
          %p186 = scmp.lt.s32.totalorder %s14, 1
          %s187 = scalar_select %p186, %s14, 1
          %s188 = smul.addr %s187, 8
          %s189 = smul.addr %s188, 8
          %s190 = scalar_lea.vmem %s3, %s189
        $region32: #{tpu_custom_call.1} parent=27 // pred_fallthru
          _
        // Predicated region
        $region33: #{tpu_custom_call.1} parent=27 // pred_check
          %p191 = pneg %p123
        $region34: #{tpu_custom_call.1} parent=27 // pred_check_branch
          %193 = sbr.rel (%p191) target = $region36
        $region35: #{tpu_custom_call.1} parent=27 // pred_region
          %p194 = scmp.lt.s32.totalorder %s14, 1
          %s195 = scalar_select %p194, %s14, 1
          %s196 = smul.addr %s195, 8
          %s197 = smul.addr %s196, 8
          %s198 = scalar_lea.vmem %s4, %s197
        $region36: #{tpu_custom_call.1} parent=27 // pred_fallthru
          _
      $region28: #{tpu_custom_call.1} parent=5 // pred_fallthru
        _
      %p199 = scmp.le.s32.totalorder 1, %s14
      %p200 = scmp.lt.s32.totalorder %s14, 3
      %p201 = pnand %p199, %p200
      %p202 = pneg %p201
      // Predicated region
      $region37: #{tpu_custom_call.1} parent=5 // pred_check
        _
      $region38: #{tpu_custom_call.1} parent=5 // pred_check_branch
        %204 = sbr.rel (%p201) target = $region40
      $region39: #{tpu_custom_call.1} parent=5 // pred_region
        %s205 = ssub.s32 %s14, 1
        %p206 = pneg %p35
        %p207 = pneg %p32
        %p208 = pneg %p56
        %p209 = pneg %p53
        %p210 = pneg %p77
        %p211 = pneg %p74
        %p212 = scmp.lt.s32.totalorder %s19, 1
        %s213 = scalar_select %p212, %s19, 1
        %s214 = smul.addr %s213, 8
        %s215 = smul.addr %s214, 8
        %s216 = scalar_lea.vmem %s3, %s215
        %p217 = pneg %p103
        %p218 = pneg %p100
        %p219 = scmp.lt.s32.totalorder %s19, 1
        %s220 = scalar_select %p219, %s19, 1
        %s221 = smul.addr %s220, 8
        %s222 = smul.addr %s221, 8
        %s223 = scalar_lea.vmem %s4, %s222
        %p224 = pneg %p129
        %p225 = pneg %p126
        %p226 = pneg %p155
        %p227 = pneg %p152
        %s228 = sand.u32 %s142, 1
        %s229 = scalar_lea.sflag [#allocation3], %s228
        %s230 = sand.u32 %s142, 1
        %s231 = smul.addr %s230, 8
        %s232 = scalar_lea.vmem [#allocation2], %s231
        %p233 = scmp.lt.s32.totalorder %s19, 1
        %s234 = scalar_select %p233, %s19, 1
        %s235 = smul.addr %s234, 8
        %s236 = smul.addr %s235, 8
        %s237 = scalar_lea.vmem %s3, %s236
        %p238 = scmp.lt.s32.totalorder %s19, 1
        %s239 = scalar_select %p238, %s19, 1
        %s240 = smul.addr %s239, 8
        %s241 = smul.addr %s240, 8
        %s242 = scalar_lea.vmem %s4, %s241
        %v244 = vld [vmem:[%s0] sm:$0xf]
        %v245 = vld [vmem:[%s0 + $0x4] sm:$0xf]
        %v246 = vld [vmem:[%s1] sm:$0xf]
        %v247 = vld [vmem:[%s1 + $0x4] sm:$0xf]
        %v248 = vld [vmem:[%s1 + $0x8] sm:$0xf]
        %v249 = vld [vmem:[%s1 + $0xc] sm:$0xf]
        %v250 = vld [vmem:[%s1 + $0x10] sm:$0xf]
        %v251 = vld [vmem:[%s1 + $0x14] sm:$0xf]
        %v252 = vld [vmem:[%s1 + $0x18] sm:$0xf]
        %v253 = vld [vmem:[%s1 + $0x1c] sm:$0xf]
        %v254 = vld [vmem:[%s2] sm:$0xff]
        %v255 = vld [vmem:[%s2 + $0x8] sm:$0xff]
        %v256 = vld [vmem:[%s2 + $0x10] sm:$0xff]
        %v257 = vld [vmem:[%s2 + $0x18] sm:$0xff]
        %v258 = vld [vmem:[%s2 + $0x20] sm:$0xff]
        %v259 = vld [vmem:[%s2 + $0x28] sm:$0xff]
        %v260 = vld [vmem:[%s2 + $0x30] sm:$0xff]
        %v261 = vld [vmem:[%s2 + $0x38] sm:$0xff]
        %v262 = vld [vmem:[%s237] sm:$0xff]
        %v263 = vld [vmem:[%s237 + $0x8] sm:$0xff]
        %v264 = vld [vmem:[%s237 + $0x10] sm:$0xff]
        %v265 = vld [vmem:[%s237 + $0x18] sm:$0xff]
        %v266 = vld [vmem:[%s237 + $0x20] sm:$0xff]
        %v267 = vld [vmem:[%s237 + $0x28] sm:$0xff]
        %v268 = vld [vmem:[%s237 + $0x30] sm:$0xff]
        %v269 = vld [vmem:[%s237 + $0x38] sm:$0xff]
        %v270 = vmin.f32 %v262, 1.0
        %v271 = vmin.f32 %v263, 1.0
        %v272 = vmin.f32 %v264, 1.0
        %v273 = vmin.f32 %v265, 1.0
        %v274 = vmin.f32 %v266, 1.0
        %v275 = vmin.f32 %v267, 1.0
        %v276 = vmin.f32 %v268, 1.0
        %v277 = vmin.f32 %v269, 1.0
        %v278 = vld [vmem:[%s242] sm:$0xff]
        %v279 = vld [vmem:[%s242 + $0x8] sm:$0xff]
        %v280 = vld [vmem:[%s242 + $0x10] sm:$0xff]
        %v281 = vld [vmem:[%s242 + $0x18] sm:$0xff]
        %v282 = vld [vmem:[%s242 + $0x20] sm:$0xff]
        %v283 = vld [vmem:[%s242 + $0x28] sm:$0xff]
        %v284 = vld [vmem:[%s242 + $0x30] sm:$0xff]
        %v285 = vld [vmem:[%s242 + $0x38] sm:$0xff]
        %v286 = vpack.c.bf16 %v271, %v270
        %v287 = vpack.c.bf16 %v273, %v272
        %v288 = vpack.c.bf16 %v275, %v274
        %v289 = vpack.c.bf16 %v277, %v276
        %v290 = vpack.c.bf16 %v279, %v278
        %v291 = vpack.c.bf16 %v281, %v280
        %v292 = vpack.c.bf16 %v283, %v282
        %v293 = vpack.c.bf16 %v285, %v284
        %v294 = vmul.f32 %v270, %v270
        %v295 = vmul.f32 %v271, %v271
        %v296 = vmul.f32 %v272, %v272
        %v297 = vmul.f32 %v273, %v273
        %v298 = vmul.f32 %v274, %v274
        %v299 = vmul.f32 %v275, %v275
        %v300 = vmul.f32 %v276, %v276
        %v301 = vmul.f32 %v277, %v277
        %v302 = vpack.c.bf16 %v295, %v294
        %v303 = vpack.c.bf16 %v297, %v296
        %v304 = vpack.c.bf16 %v299, %v298
        %v305 = vpack.c.bf16 %v301, %v300
        %v306 = vmul.f32 %v278, %v278
        %v307 = vmul.f32 %v279, %v279
        %v308 = vmul.f32 %v280, %v280
        %v309 = vmul.f32 %v281, %v281
        %v310 = vmul.f32 %v282, %v282
        %v311 = vmul.f32 %v283, %v283
        %v312 = vmul.f32 %v284, %v284
        %v313 = vmul.f32 %v285, %v285
        %v314 = vpack.c.bf16 %v307, %v306
        %v315 = vpack.c.bf16 %v309, %v308
        %v316 = vpack.c.bf16 %v311, %v310
        %v317 = vpack.c.bf16 %v313, %v312
        %v318 = vmul.f32 %v270, %v278
        %v319 = vmul.f32 %v271, %v279
        %v320 = vmul.f32 %v272, %v280
        %v321 = vmul.f32 %v273, %v281
        %v322 = vmul.f32 %v274, %v282
        %v323 = vmul.f32 %v275, %v283
        %v324 = vmul.f32 %v276, %v284
        %v325 = vmul.f32 %v277, %v285
        %v326 = vpack.c.bf16 %v319, %v318
        %v327 = vpack.c.bf16 %v321, %v320
        %v328 = vpack.c.bf16 %v323, %v322
        %v329 = vpack.c.bf16 %v325, %v324
        %v332 = vunpack.c.l.b16 %v244
        %v333 = vunpack.c.l.b16 %v245
        %v334 = vpack.c.b16 %v333, %v332
        %vm336 = vcmask 130048
        %v338 = vsel %vm336, %v286, 0
        %v341 = vsel %vm336, %v287, 0
        %v344 = vsel %vm336, %v288, 0
        %v347 = vsel %vm336, %v289, 0
        %v350 = vsel %vm336, %v290, 0
        %v353 = vsel %vm336, %v291, 0
        %v356 = vsel %vm336, %v292, 0
        %v359 = vsel %vm336, %v293, 0
        %v362 = vsel %vm336, %v302, 0
        %v365 = vsel %vm336, %v303, 0
        %v368 = vsel %vm336, %v304, 0
        %v371 = vsel %vm336, %v305, 0
        %v374 = vsel %vm336, %v314, 0
        %v377 = vsel %vm336, %v315, 0
        %v380 = vsel %vm336, %v316, 0
        %v383 = vsel %vm336, %v317, 0
        %v386 = vsel %vm336, %v326, 0
        %v389 = vsel %vm336, %v327, 0
        %v392 = vsel %vm336, %v328, 0
        %v395 = vsel %vm336, %v329, 0
        %397 = vmatprep.subr.bf16.mxu0 0
        %398 = vmatpush1.bf16.msra.mxu0 0
        %399 = vmatprep.subr.bf16.mxu0 0
        %400 = vmatpush1.bf16.msra.mxu0 0
        %401 = vmatprep.subr.bf16.mxu0 0
        %402 = vmatpush1.bf16.msra.mxu0 0
        %403 = vmatprep.subr.bf16.mxu0 0
        %404 = vmatpush1.bf16.msra.mxu0 0
        %405 = vmatprep.subr.bf16.mxu0 0
        %406 = vmatpush1.bf16.msra.mxu0 0
        %407 = vmatprep.subr.bf16.mxu0 0
        %408 = vmatpush1.bf16.msra.mxu0 0
        %409 = vmatprep.subr.bf16.mxu0 0
        %410 = vmatpush1.bf16.msra.mxu0 0
        %411 = vmatprep.subr.bf16.mxu0 0
        %412 = vmatpush1.bf16.msra.mxu0 %v334
        %413 = vmatprep.subr.bf16.mxu0 0
        %414 = vmatpush2.bf16.msra.mxu0 0
        %415 = vmatprep.subr.bf16.mxu0 0
        %416 = vmatpush2.bf16.msra.mxu0 0
        %417 = vmatprep.subr.bf16.mxu0 0
        %418 = vmatpush2.bf16.msra.mxu0 0
        %419 = vmatprep.subr.bf16.mxu0 0
        %420 = vmatpush2.bf16.msra.mxu0 0
        %421 = vmatprep.subr.bf16.mxu0 0
        %422 = vmatpush2.bf16.msra.mxu0 0
        %423 = vmatprep.subr.bf16.mxu0 0
        %424 = vmatpush2.bf16.msra.mxu0 0
        %425 = vmatprep.subr.bf16.mxu0 0
        %426 = vmatpush2.bf16.msra.mxu0 0
        %427 = vmatprep.subr.bf16.mxu0 0
        %428 = vmatpush2.bf16.msra.mxu0 0
        %429 = vmatprep.mubr.bf16.mxu0 0
        %430 = vmatmul.mubr.bf16.gmra.mxu0 %v338
        %v431 = vpop.f32.mrf.mxu0
        %v432 = vadd.f32 0.0, %v431
        %v433 = vpop.f32.mrf.mxu0
        %v434 = vpop.f32.mrf.mxu0
        %v435 = vadd.f32 0.0, %v434
        %v436 = vpop.f32.mrf.mxu0
        %437 = vmatprep.mubr.bf16.mxu0 0
        %438 = vmatmul.mubr.bf16.gmra.mxu0 %v341
        %v439 = vpop.f32.mrf.mxu0
        %v440 = vadd.f32 0.0, %v439
        %v441 = vpop.f32.mrf.mxu0
        %v442 = vpop.f32.mrf.mxu0
        %v443 = vadd.f32 0.0, %v442
        %v444 = vpop.f32.mrf.mxu0
        %445 = vmatprep.mubr.bf16.mxu0 0
        %446 = vmatmul.mubr.bf16.gmra.mxu0 %v344
        %v447 = vpop.f32.mrf.mxu0
        %v448 = vadd.f32 0.0, %v447
        %v449 = vpop.f32.mrf.mxu0
        %v450 = vpop.f32.mrf.mxu0
        %v451 = vadd.f32 0.0, %v450
        %v452 = vpop.f32.mrf.mxu0
        %453 = vmatprep.mubr.bf16.mxu0 0
        %454 = vmatmul.mubr.bf16.gmra.mxu0 %v347
        %v455 = vpop.f32.mrf.mxu0
        %v456 = vadd.f32 0.0, %v455
        %v457 = vpop.f32.mrf.mxu0
        %v458 = vpop.f32.mrf.mxu0
        %v459 = vadd.f32 0.0, %v458
        %v460 = vpop.f32.mrf.mxu0
        %461 = vmatprep.mubr.bf16.mxu0 0
        %462 = vmatmul.mubr.bf16.gmra.mxu0 %v350
        %v463 = vpop.f32.mrf.mxu0
        %v464 = vadd.f32 0.0, %v463
        %v465 = vpop.f32.mrf.mxu0
        %v466 = vpop.f32.mrf.mxu0
        %v467 = vadd.f32 0.0, %v466
        %v468 = vpop.f32.mrf.mxu0
        %469 = vmatprep.mubr.bf16.mxu0 0
        %470 = vmatmul.mubr.bf16.gmra.mxu0 %v353
        %v471 = vpop.f32.mrf.mxu0
        %v472 = vadd.f32 0.0, %v471
        %v473 = vpop.f32.mrf.mxu0
        %v474 = vpop.f32.mrf.mxu0
        %v475 = vadd.f32 0.0, %v474
        %v476 = vpop.f32.mrf.mxu0
        %477 = vmatprep.mubr.bf16.mxu0 0
        %478 = vmatmul.mubr.bf16.gmra.mxu0 %v356
        %v479 = vpop.f32.mrf.mxu0
        %v480 = vadd.f32 0.0, %v479
        %v481 = vpop.f32.mrf.mxu0
        %v482 = vpop.f32.mrf.mxu0
        %v483 = vadd.f32 0.0, %v482
        %v484 = vpop.f32.mrf.mxu0
        %485 = vmatprep.mubr.bf16.mxu0 0
        %486 = vmatmul.mubr.bf16.gmra.mxu0 %v359
        %v487 = vpop.f32.mrf.mxu0
        %v488 = vadd.f32 0.0, %v487
        %v489 = vpop.f32.mrf.mxu0
        %v490 = vpop.f32.mrf.mxu0
        %v491 = vadd.f32 0.0, %v490
        %v492 = vpop.f32.mrf.mxu0
        %493 = vmatprep.mubr.bf16.mxu0 0
        %494 = vmatmul.mubr.bf16.gmra.mxu0 %v362
        %v495 = vpop.f32.mrf.mxu0
        %v496 = vadd.f32 0.0, %v495
        %v497 = vpop.f32.mrf.mxu0
        %v498 = vpop.f32.mrf.mxu0
        %v499 = vadd.f32 0.0, %v498
        %v500 = vpop.f32.mrf.mxu0
        %501 = vmatprep.mubr.bf16.mxu0 0
        %502 = vmatmul.mubr.bf16.gmra.mxu0 %v365
        %v503 = vpop.f32.mrf.mxu0
        %v504 = vadd.f32 0.0, %v503
        %v505 = vpop.f32.mrf.mxu0
        %v506 = vpop.f32.mrf.mxu0
        %v507 = vadd.f32 0.0, %v506
        %v508 = vpop.f32.mrf.mxu0
        %509 = vmatprep.mubr.bf16.mxu0 0
        %510 = vmatmul.mubr.bf16.gmra.mxu0 %v368
        %v511 = vpop.f32.mrf.mxu0
        %v512 = vadd.f32 0.0, %v511
        %v513 = vpop.f32.mrf.mxu0
        %v514 = vpop.f32.mrf.mxu0
        %v515 = vadd.f32 0.0, %v514
        %v516 = vpop.f32.mrf.mxu0
        %517 = vmatprep.mubr.bf16.mxu0 0
        %518 = vmatmul.mubr.bf16.gmra.mxu0 %v371
        %v519 = vpop.f32.mrf.mxu0
        %v520 = vadd.f32 0.0, %v519
        %v521 = vpop.f32.mrf.mxu0
        %v522 = vpop.f32.mrf.mxu0
        %v523 = vadd.f32 0.0, %v522
        %v524 = vpop.f32.mrf.mxu0
        %525 = vmatprep.mubr.bf16.mxu0 0
        %526 = vmatmul.mubr.bf16.gmra.mxu0 %v374
        %v527 = vpop.f32.mrf.mxu0
        %v528 = vadd.f32 0.0, %v527
        %v529 = vpop.f32.mrf.mxu0
        %v530 = vpop.f32.mrf.mxu0
        %v531 = vadd.f32 0.0, %v530
        %v532 = vpop.f32.mrf.mxu0
        %533 = vmatprep.mubr.bf16.mxu0 0
        %534 = vmatmul.mubr.bf16.gmra.mxu0 %v377
        %v535 = vpop.f32.mrf.mxu0
        %v536 = vadd.f32 0.0, %v535
        %v537 = vpop.f32.mrf.mxu0
        %v538 = vpop.f32.mrf.mxu0
        %v539 = vadd.f32 0.0, %v538
        %v540 = vpop.f32.mrf.mxu0
        %541 = vmatprep.mubr.bf16.mxu0 0
        %542 = vmatmul.mubr.bf16.gmra.mxu0 %v380
        %v543 = vpop.f32.mrf.mxu0
        %v544 = vadd.f32 0.0, %v543
        %v545 = vpop.f32.mrf.mxu0
        %v546 = vpop.f32.mrf.mxu0
        %v547 = vadd.f32 0.0, %v546
        %v548 = vpop.f32.mrf.mxu0
        %549 = vmatprep.mubr.bf16.mxu0 0
        %550 = vmatmul.mubr.bf16.gmra.mxu0 %v383
        %v551 = vpop.f32.mrf.mxu0
        %v552 = vadd.f32 0.0, %v551
        %v553 = vpop.f32.mrf.mxu0
        %v554 = vpop.f32.mrf.mxu0
        %v555 = vadd.f32 0.0, %v554
        %v556 = vpop.f32.mrf.mxu0
        %557 = vmatprep.mubr.bf16.mxu0 0
        %558 = vmatmul.mubr.bf16.gmra.mxu0 %v386
        %v559 = vpop.f32.mrf.mxu0
        %v560 = vadd.f32 0.0, %v559
        %v561 = vpop.f32.mrf.mxu0
        %v562 = vpop.f32.mrf.mxu0
        %v563 = vadd.f32 0.0, %v562
        %v564 = vpop.f32.mrf.mxu0
        %565 = vmatprep.mubr.bf16.mxu0 0
        %566 = vmatmul.mubr.bf16.gmra.mxu0 %v389
        %v567 = vpop.f32.mrf.mxu0
        %v568 = vadd.f32 0.0, %v567
        %v569 = vpop.f32.mrf.mxu0
        %v570 = vpop.f32.mrf.mxu0
        %v571 = vadd.f32 0.0, %v570
        %v572 = vpop.f32.mrf.mxu0
        %573 = vmatprep.mubr.bf16.mxu0 0
        %574 = vmatmul.mubr.bf16.gmra.mxu0 %v392
        %v575 = vpop.f32.mrf.mxu0
        %v576 = vadd.f32 0.0, %v575
        %v577 = vpop.f32.mrf.mxu0
        %v578 = vpop.f32.mrf.mxu0
        %v579 = vadd.f32 0.0, %v578
        %v580 = vpop.f32.mrf.mxu0
        %581 = vmatprep.mubr.bf16.mxu0 0
        %582 = vmatmul.mubr.bf16.gmra.mxu0 %v395
        %v583 = vpop.f32.mrf.mxu0
        %v584 = vadd.f32 0.0, %v583
        %v585 = vpop.f32.mrf.mxu0
        %v586 = vpop.f32.mrf.mxu0
        %v587 = vadd.f32 0.0, %v586
        %v588 = vpop.f32.mrf.mxu0
        %589 = vdwg.mxu0
        %v590 = vpack.c.bf16 %v435, %v432
        %v591 = vpack.c.bf16 %v443, %v440
        %v592 = vpack.c.bf16 %v451, %v448
        %v593 = vpack.c.bf16 %v459, %v456
        %v602 = vunpack.c.l.b16 %v246
        %v603 = vunpack.c.l.b16 %v247
        %v604 = vunpack.c.l.b16 %v248
        %v605 = vunpack.c.l.b16 %v249
        %v606 = vunpack.c.l.b16 %v250
        %v607 = vunpack.c.l.b16 %v251
        %v608 = vunpack.c.l.b16 %v252
        %v609 = vunpack.c.l.b16 %v253
        %v610 = vpack.c.b16 %v603, %v602
        %v611 = vpack.c.b16 %v605, %v604
        %v612 = vpack.c.b16 %v607, %v606
        %v613 = vpack.c.b16 %v609, %v608
        %vm614 = vcmask 523264
        %v616 = vsel %vm614, %v610, 0
        %v619 = vsel %vm614, %v611, 0
        %v622 = vsel %vm614, %v612, 0
        %v625 = vsel %vm614, %v613, 0
        %627 = vmatprep.subr.bf16.mxu0 0
        %628 = vmatpush1.bf16.msra.mxu0 0
        %629 = vmatprep.subr.bf16.mxu0 0
        %630 = vmatpush1.bf16.msra.mxu0 0
        %631 = vmatprep.subr.bf16.mxu0 0
        %632 = vmatpush1.bf16.msra.mxu0 0
        %633 = vmatprep.subr.bf16.mxu0 0
        %634 = vmatpush1.bf16.msra.mxu0 0
        %635 = vmatprep.subr.bf16.mxu0 0
        %636 = vmatpush1.bf16.msra.mxu0 %v593
        %637 = vmatprep.subr.bf16.mxu0 0
        %638 = vmatpush1.bf16.msra.mxu0 %v592
        %639 = vmatprep.subr.bf16.mxu0 0
        %640 = vmatpush1.bf16.msra.mxu0 %v591
        %641 = vmatprep.subr.bf16.mxu0 0
        %642 = vmatpush1.bf16.msra.mxu0 %v590
        %643 = vmatprep.subr.bf16.mxu0 0
        %644 = vmatpush2.bf16.msra.mxu0 0
        %645 = vmatprep.subr.bf16.mxu0 0
        %646 = vmatpush2.bf16.msra.mxu0 0
        %647 = vmatprep.subr.bf16.mxu0 0
        %648 = vmatpush2.bf16.msra.mxu0 0
        %649 = vmatprep.subr.bf16.mxu0 0
        %650 = vmatpush2.bf16.msra.mxu0 0
        %651 = vmatprep.subr.bf16.mxu0 0
        %652 = vmatpush2.bf16.msra.mxu0 0
        %653 = vmatprep.subr.bf16.mxu0 0
        %654 = vmatpush2.bf16.msra.mxu0 0
        %655 = vmatprep.subr.bf16.mxu0 0
        %656 = vmatpush2.bf16.msra.mxu0 0
        %657 = vmatprep.subr.bf16.mxu0 0
        %658 = vmatpush2.bf16.msra.mxu0 0
        %659 = vmatprep.mubr.bf16.mxu0 0
        %660 = vmatmul.mubr.bf16.gmra.mxu0 %v616
        %v661 = vpop.f32.mrf.mxu0
        %v662 = vadd.f32 0.0, %v661
        %v663 = vpop.f32.mrf.mxu0
        %v664 = vpop.f32.mrf.mxu0
        %v665 = vadd.f32 0.0, %v664
        %v666 = vpop.f32.mrf.mxu0
        %667 = vmatprep.mubr.bf16.mxu0 0
        %668 = vmatmul.mubr.bf16.gmra.mxu0 %v619
        %v669 = vpop.f32.mrf.mxu0
        %v670 = vadd.f32 0.0, %v669
        %v671 = vpop.f32.mrf.mxu0
        %v672 = vpop.f32.mrf.mxu0
        %v673 = vadd.f32 0.0, %v672
        %v674 = vpop.f32.mrf.mxu0
        %675 = vmatprep.mubr.bf16.mxu0 0
        %676 = vmatmul.mubr.bf16.gmra.mxu0 %v622
        %v677 = vpop.f32.mrf.mxu0
        %v678 = vadd.f32 0.0, %v677
        %v679 = vpop.f32.mrf.mxu0
        %v680 = vpop.f32.mrf.mxu0
        %v681 = vadd.f32 0.0, %v680
        %v682 = vpop.f32.mrf.mxu0
        %683 = vmatprep.mubr.bf16.mxu0 0
        %684 = vmatmul.mubr.bf16.gmra.mxu0 %v625
        %v685 = vpop.f32.mrf.mxu0
        %v686 = vadd.f32 0.0, %v685
        %v687 = vpop.f32.mrf.mxu0
        %v688 = vpop.f32.mrf.mxu0
        %v689 = vadd.f32 0.0, %v688
        %v690 = vpop.f32.mrf.mxu0
        %691 = vdwg.mxu0
        %v692 = vmul.f32 %v662, %v254
        %v693 = vmul.f32 %v665, %v255
        %v694 = vmul.f32 %v670, %v256
        %v695 = vmul.f32 %v673, %v257
        %v696 = vmul.f32 %v678, %v258
        %v697 = vmul.f32 %v681, %v259
        %v698 = vmul.f32 %v686, %v260
        %v699 = vmul.f32 %v689, %v261
        %v700 = vpack.c.bf16 %v467, %v464
        %v701 = vpack.c.bf16 %v475, %v472
        %v702 = vpack.c.bf16 %v483, %v480
        %v703 = vpack.c.bf16 %v491, %v488
        %704 = vmatprep.subr.bf16.mxu0 0
        %705 = vmatpush1.bf16.msra.mxu0 0
        %706 = vmatprep.subr.bf16.mxu0 0
        %707 = vmatpush1.bf16.msra.mxu0 0
        %708 = vmatprep.subr.bf16.mxu0 0
        %709 = vmatpush1.bf16.msra.mxu0 0
        %710 = vmatprep.subr.bf16.mxu0 0
        %711 = vmatpush1.bf16.msra.mxu0 0
        %712 = vmatprep.subr.bf16.mxu0 0
        %713 = vmatpush1.bf16.msra.mxu0 %v703
        %714 = vmatprep.subr.bf16.mxu0 0
        %715 = vmatpush1.bf16.msra.mxu0 %v702
        %716 = vmatprep.subr.bf16.mxu0 0
        %717 = vmatpush1.bf16.msra.mxu0 %v701
        %718 = vmatprep.subr.bf16.mxu0 0
        %719 = vmatpush1.bf16.msra.mxu0 %v700
        %720 = vmatprep.subr.bf16.mxu0 0
        %721 = vmatpush2.bf16.msra.mxu0 0
        %722 = vmatprep.subr.bf16.mxu0 0
        %723 = vmatpush2.bf16.msra.mxu0 0
        %724 = vmatprep.subr.bf16.mxu0 0
        %725 = vmatpush2.bf16.msra.mxu0 0
        %726 = vmatprep.subr.bf16.mxu0 0
        %727 = vmatpush2.bf16.msra.mxu0 0
        %728 = vmatprep.subr.bf16.mxu0 0
        %729 = vmatpush2.bf16.msra.mxu0 0
        %730 = vmatprep.subr.bf16.mxu0 0
        %731 = vmatpush2.bf16.msra.mxu0 0
        %732 = vmatprep.subr.bf16.mxu0 0
        %733 = vmatpush2.bf16.msra.mxu0 0
        %734 = vmatprep.subr.bf16.mxu0 0
        %735 = vmatpush2.bf16.msra.mxu0 0
        %736 = vmatprep.mubr.bf16.mxu0 0
        %737 = vmatmul.mubr.bf16.gmra.mxu0 %v616
        %v738 = vpop.f32.mrf.mxu0
        %v739 = vadd.f32 0.0, %v738
        %v740 = vpop.f32.mrf.mxu0
        %v741 = vpop.f32.mrf.mxu0
        %v742 = vadd.f32 0.0, %v741
        %v743 = vpop.f32.mrf.mxu0
        %744 = vmatprep.mubr.bf16.mxu0 0
        %745 = vmatmul.mubr.bf16.gmra.mxu0 %v619
        %v746 = vpop.f32.mrf.mxu0
        %v747 = vadd.f32 0.0, %v746
        %v748 = vpop.f32.mrf.mxu0
        %v749 = vpop.f32.mrf.mxu0
        %v750 = vadd.f32 0.0, %v749
        %v751 = vpop.f32.mrf.mxu0
        %752 = vmatprep.mubr.bf16.mxu0 0
        %753 = vmatmul.mubr.bf16.gmra.mxu0 %v622
        %v754 = vpop.f32.mrf.mxu0
        %v755 = vadd.f32 0.0, %v754
        %v756 = vpop.f32.mrf.mxu0
        %v757 = vpop.f32.mrf.mxu0
        %v758 = vadd.f32 0.0, %v757
        %v759 = vpop.f32.mrf.mxu0
        %760 = vmatprep.mubr.bf16.mxu0 0
        %761 = vmatmul.mubr.bf16.gmra.mxu0 %v625
        %v762 = vpop.f32.mrf.mxu0
        %v763 = vadd.f32 0.0, %v762
        %v764 = vpop.f32.mrf.mxu0
        %v765 = vpop.f32.mrf.mxu0
        %v766 = vadd.f32 0.0, %v765
        %v767 = vpop.f32.mrf.mxu0
        %768 = vdwg.mxu0
        %v769 = vmul.f32 %v739, %v254
        %v770 = vmul.f32 %v742, %v255
        %v771 = vmul.f32 %v747, %v256
        %v772 = vmul.f32 %v750, %v257
        %v773 = vmul.f32 %v755, %v258
        %v774 = vmul.f32 %v758, %v259
        %v775 = vmul.f32 %v763, %v260
        %v776 = vmul.f32 %v766, %v261
        %v777 = vpack.c.bf16 %v499, %v496
        %v778 = vpack.c.bf16 %v507, %v504
        %v779 = vpack.c.bf16 %v515, %v512
        %v780 = vpack.c.bf16 %v523, %v520
        %781 = vmatprep.subr.bf16.mxu0 0
        %782 = vmatpush1.bf16.msra.mxu0 0
        %783 = vmatprep.subr.bf16.mxu0 0
        %784 = vmatpush1.bf16.msra.mxu0 0
        %785 = vmatprep.subr.bf16.mxu0 0
        %786 = vmatpush1.bf16.msra.mxu0 0
        %787 = vmatprep.subr.bf16.mxu0 0
        %788 = vmatpush1.bf16.msra.mxu0 0
        %789 = vmatprep.subr.bf16.mxu0 0
        %790 = vmatpush1.bf16.msra.mxu0 %v780
        %791 = vmatprep.subr.bf16.mxu0 0
        %792 = vmatpush1.bf16.msra.mxu0 %v779
        %793 = vmatprep.subr.bf16.mxu0 0
        %794 = vmatpush1.bf16.msra.mxu0 %v778
        %795 = vmatprep.subr.bf16.mxu0 0
        %796 = vmatpush1.bf16.msra.mxu0 %v777
        %797 = vmatprep.subr.bf16.mxu0 0
        %798 = vmatpush2.bf16.msra.mxu0 0
        %799 = vmatprep.subr.bf16.mxu0 0
        %800 = vmatpush2.bf16.msra.mxu0 0
        %801 = vmatprep.subr.bf16.mxu0 0
        %802 = vmatpush2.bf16.msra.mxu0 0
        %803 = vmatprep.subr.bf16.mxu0 0
        %804 = vmatpush2.bf16.msra.mxu0 0
        %805 = vmatprep.subr.bf16.mxu0 0
        %806 = vmatpush2.bf16.msra.mxu0 0
        %807 = vmatprep.subr.bf16.mxu0 0
        %808 = vmatpush2.bf16.msra.mxu0 0
        %809 = vmatprep.subr.bf16.mxu0 0
        %810 = vmatpush2.bf16.msra.mxu0 0
        %811 = vmatprep.subr.bf16.mxu0 0
        %812 = vmatpush2.bf16.msra.mxu0 0
        %813 = vmatprep.mubr.bf16.mxu0 0
        %814 = vmatmul.mubr.bf16.gmra.mxu0 %v616
        %v815 = vpop.f32.mrf.mxu0
        %v816 = vadd.f32 0.0, %v815
        %v817 = vpop.f32.mrf.mxu0
        %v818 = vpop.f32.mrf.mxu0
        %v819 = vadd.f32 0.0, %v818
        %v820 = vpop.f32.mrf.mxu0
        %821 = vmatprep.mubr.bf16.mxu0 0
        %822 = vmatmul.mubr.bf16.gmra.mxu0 %v619
        %v823 = vpop.f32.mrf.mxu0
        %v824 = vadd.f32 0.0, %v823
        %v825 = vpop.f32.mrf.mxu0
        %v826 = vpop.f32.mrf.mxu0
        %v827 = vadd.f32 0.0, %v826
        %v828 = vpop.f32.mrf.mxu0
        %829 = vmatprep.mubr.bf16.mxu0 0
        %830 = vmatmul.mubr.bf16.gmra.mxu0 %v622
        %v831 = vpop.f32.mrf.mxu0
        %v832 = vadd.f32 0.0, %v831
        %v833 = vpop.f32.mrf.mxu0
        %v834 = vpop.f32.mrf.mxu0
        %v835 = vadd.f32 0.0, %v834
        %v836 = vpop.f32.mrf.mxu0
        %837 = vmatprep.mubr.bf16.mxu0 0
        %838 = vmatmul.mubr.bf16.gmra.mxu0 %v625
        %v839 = vpop.f32.mrf.mxu0
        %v840 = vadd.f32 0.0, %v839
        %v841 = vpop.f32.mrf.mxu0
        %v842 = vpop.f32.mrf.mxu0
        %v843 = vadd.f32 0.0, %v842
        %v844 = vpop.f32.mrf.mxu0
        %845 = vdwg.mxu0
        %v846 = vmul.f32 %v816, %v254
        %v847 = vmul.f32 %v819, %v255
        %v848 = vmul.f32 %v824, %v256
        %v849 = vmul.f32 %v827, %v257
        %v850 = vmul.f32 %v832, %v258
        %v851 = vmul.f32 %v835, %v259
        %v852 = vmul.f32 %v840, %v260
        %v853 = vmul.f32 %v843, %v261
        %v854 = vpack.c.bf16 %v531, %v528
        %v855 = vpack.c.bf16 %v539, %v536
        %v856 = vpack.c.bf16 %v547, %v544
        %v857 = vpack.c.bf16 %v555, %v552
        %858 = vmatprep.subr.bf16.mxu0 0
        %859 = vmatpush1.bf16.msra.mxu0 0
        %860 = vmatprep.subr.bf16.mxu0 0
        %861 = vmatpush1.bf16.msra.mxu0 0
        %862 = vmatprep.subr.bf16.mxu0 0
        %863 = vmatpush1.bf16.msra.mxu0 0
        %864 = vmatprep.subr.bf16.mxu0 0
        %865 = vmatpush1.bf16.msra.mxu0 0
        %866 = vmatprep.subr.bf16.mxu0 0
        %867 = vmatpush1.bf16.msra.mxu0 %v857
        %868 = vmatprep.subr.bf16.mxu0 0
        %869 = vmatpush1.bf16.msra.mxu0 %v856
        %870 = vmatprep.subr.bf16.mxu0 0
        %871 = vmatpush1.bf16.msra.mxu0 %v855
        %872 = vmatprep.subr.bf16.mxu0 0
        %873 = vmatpush1.bf16.msra.mxu0 %v854
        %874 = vmatprep.subr.bf16.mxu0 0
        %875 = vmatpush2.bf16.msra.mxu0 0
        %876 = vmatprep.subr.bf16.mxu0 0
        %877 = vmatpush2.bf16.msra.mxu0 0
        %878 = vmatprep.subr.bf16.mxu0 0
        %879 = vmatpush2.bf16.msra.mxu0 0
        %880 = vmatprep.subr.bf16.mxu0 0
        %881 = vmatpush2.bf16.msra.mxu0 0
        %882 = vmatprep.subr.bf16.mxu0 0
        %883 = vmatpush2.bf16.msra.mxu0 0
        %884 = vmatprep.subr.bf16.mxu0 0
        %885 = vmatpush2.bf16.msra.mxu0 0
        %886 = vmatprep.subr.bf16.mxu0 0
        %887 = vmatpush2.bf16.msra.mxu0 0
        %888 = vmatprep.subr.bf16.mxu0 0
        %889 = vmatpush2.bf16.msra.mxu0 0
        %890 = vmatprep.mubr.bf16.mxu0 0
        %891 = vmatmul.mubr.bf16.gmra.mxu0 %v616
        %v892 = vpop.f32.mrf.mxu0
        %v893 = vadd.f32 0.0, %v892
        %v894 = vpop.f32.mrf.mxu0
        %v895 = vpop.f32.mrf.mxu0
        %v896 = vadd.f32 0.0, %v895
        %v897 = vpop.f32.mrf.mxu0
        %898 = vmatprep.mubr.bf16.mxu0 0
        %899 = vmatmul.mubr.bf16.gmra.mxu0 %v619
        %v900 = vpop.f32.mrf.mxu0
        %v901 = vadd.f32 0.0, %v900
        %v902 = vpop.f32.mrf.mxu0
        %v903 = vpop.f32.mrf.mxu0
        %v904 = vadd.f32 0.0, %v903
        %v905 = vpop.f32.mrf.mxu0
        %906 = vmatprep.mubr.bf16.mxu0 0
        %907 = vmatmul.mubr.bf16.gmra.mxu0 %v622
        %v908 = vpop.f32.mrf.mxu0
        %v909 = vadd.f32 0.0, %v908
        %v910 = vpop.f32.mrf.mxu0
        %v911 = vpop.f32.mrf.mxu0
        %v912 = vadd.f32 0.0, %v911
        %v913 = vpop.f32.mrf.mxu0
        %914 = vmatprep.mubr.bf16.mxu0 0
        %915 = vmatmul.mubr.bf16.gmra.mxu0 %v625
        %v916 = vpop.f32.mrf.mxu0
        %v917 = vadd.f32 0.0, %v916
        %v918 = vpop.f32.mrf.mxu0
        %v919 = vpop.f32.mrf.mxu0
        %v920 = vadd.f32 0.0, %v919
        %v921 = vpop.f32.mrf.mxu0
        %922 = vdwg.mxu0
        %v923 = vmul.f32 %v893, %v254
        %v924 = vmul.f32 %v896, %v255
        %v925 = vmul.f32 %v901, %v256
        %v926 = vmul.f32 %v904, %v257
        %v927 = vmul.f32 %v909, %v258
        %v928 = vmul.f32 %v912, %v259
        %v929 = vmul.f32 %v917, %v260
        %v930 = vmul.f32 %v920, %v261
        %v931 = vpack.c.bf16 %v563, %v560
        %v932 = vpack.c.bf16 %v571, %v568
        %v933 = vpack.c.bf16 %v579, %v576
        %v934 = vpack.c.bf16 %v587, %v584
        %935 = vmatprep.subr.bf16.mxu0 0
        %936 = vmatpush1.bf16.msra.mxu0 0
        %937 = vmatprep.subr.bf16.mxu0 0
        %938 = vmatpush1.bf16.msra.mxu0 0
        %939 = vmatprep.subr.bf16.mxu0 0
        %940 = vmatpush1.bf16.msra.mxu0 0
        %941 = vmatprep.subr.bf16.mxu0 0
        %942 = vmatpush1.bf16.msra.mxu0 0
        %943 = vmatprep.subr.bf16.mxu0 0
        %944 = vmatpush1.bf16.msra.mxu0 %v934
        %945 = vmatprep.subr.bf16.mxu0 0
        %946 = vmatpush1.bf16.msra.mxu0 %v933
        %947 = vmatprep.subr.bf16.mxu0 0
        %948 = vmatpush1.bf16.msra.mxu0 %v932
        %949 = vmatprep.subr.bf16.mxu0 0
        %950 = vmatpush1.bf16.msra.mxu0 %v931
        %951 = vmatprep.subr.bf16.mxu0 0
        %952 = vmatpush2.bf16.msra.mxu0 0
        %953 = vmatprep.subr.bf16.mxu0 0
        %954 = vmatpush2.bf16.msra.mxu0 0
        %955 = vmatprep.subr.bf16.mxu0 0
        %956 = vmatpush2.bf16.msra.mxu0 0
        %957 = vmatprep.subr.bf16.mxu0 0
        %958 = vmatpush2.bf16.msra.mxu0 0
        %959 = vmatprep.subr.bf16.mxu0 0
        %960 = vmatpush2.bf16.msra.mxu0 0
        %961 = vmatprep.subr.bf16.mxu0 0
        %962 = vmatpush2.bf16.msra.mxu0 0
        %963 = vmatprep.subr.bf16.mxu0 0
        %964 = vmatpush2.bf16.msra.mxu0 0
        %965 = vmatprep.subr.bf16.mxu0 0
        %966 = vmatpush2.bf16.msra.mxu0 0
        %967 = vmatprep.mubr.bf16.mxu0 0
        %968 = vmatmul.mubr.bf16.gmra.mxu0 %v616
        %v969 = vpop.f32.mrf.mxu0
        %v970 = vadd.f32 0.0, %v969
        %v971 = vpop.f32.mrf.mxu0
        %v972 = vpop.f32.mrf.mxu0
        %v973 = vadd.f32 0.0, %v972
        %v974 = vpop.f32.mrf.mxu0
        %975 = vmatprep.mubr.bf16.mxu0 0
        %976 = vmatmul.mubr.bf16.gmra.mxu0 %v619
        %v977 = vpop.f32.mrf.mxu0
        %v978 = vadd.f32 0.0, %v977
        %v979 = vpop.f32.mrf.mxu0
        %v980 = vpop.f32.mrf.mxu0
        %v981 = vadd.f32 0.0, %v980
        %v982 = vpop.f32.mrf.mxu0
        %983 = vmatprep.mubr.bf16.mxu0 0
        %984 = vmatmul.mubr.bf16.gmra.mxu0 %v622
        %v985 = vpop.f32.mrf.mxu0
        %v986 = vadd.f32 0.0, %v985
        %v987 = vpop.f32.mrf.mxu0
        %v988 = vpop.f32.mrf.mxu0
        %v989 = vadd.f32 0.0, %v988
        %v990 = vpop.f32.mrf.mxu0
        %991 = vmatprep.mubr.bf16.mxu0 0
        %992 = vmatmul.mubr.bf16.gmra.mxu0 %v625
        %v993 = vpop.f32.mrf.mxu0
        %v994 = vadd.f32 0.0, %v993
        %v995 = vpop.f32.mrf.mxu0
        %v996 = vpop.f32.mrf.mxu0
        %v997 = vadd.f32 0.0, %v996
        %v998 = vpop.f32.mrf.mxu0
        %999 = vdwg.mxu0
        %v1000 = vmul.f32 %v970, %v254
        %v1001 = vmul.f32 %v973, %v255
        %v1002 = vmul.f32 %v978, %v256
        %v1003 = vmul.f32 %v981, %v257
        %v1004 = vmul.f32 %v986, %v258
        %v1005 = vmul.f32 %v989, %v259
        %v1006 = vmul.f32 %v994, %v260
        %v1007 = vmul.f32 %v997, %v261
        %v1008 = vmul.f32 %v692, %v692
        %v1009 = vmul.f32 %v693, %v693
        %v1010 = vmul.f32 %v694, %v694
        %v1011 = vmul.f32 %v695, %v695
        %v1012 = vmul.f32 %v696, %v696
        %v1013 = vmul.f32 %v697, %v697
        %v1014 = vmul.f32 %v698, %v698
        %v1015 = vmul.f32 %v699, %v699
        %v1016 = vmul.f32 %v769, %v769
        %v1017 = vmul.f32 %v770, %v770
        %v1018 = vmul.f32 %v771, %v771
        %v1019 = vmul.f32 %v772, %v772
        %v1020 = vmul.f32 %v773, %v773
        %v1021 = vmul.f32 %v774, %v774
        %v1022 = vmul.f32 %v775, %v775
        %v1023 = vmul.f32 %v776, %v776
        %v1024 = vmul.f32 %v692, %v769
        %v1025 = vmul.f32 %v693, %v770
        %v1026 = vmul.f32 %v694, %v771
        %v1027 = vmul.f32 %v695, %v772
        %v1028 = vmul.f32 %v696, %v773
        %v1029 = vmul.f32 %v697, %v774
        %v1030 = vmul.f32 %v698, %v775
        %v1031 = vmul.f32 %v699, %v776
        %v1032 = vsub.f32 %v846, %v1008
        %v1033 = vsub.f32 %v847, %v1009
        %v1034 = vsub.f32 %v848, %v1010
        %v1035 = vsub.f32 %v849, %v1011
        %v1036 = vsub.f32 %v850, %v1012
        %v1037 = vsub.f32 %v851, %v1013
        %v1038 = vsub.f32 %v852, %v1014
        %v1039 = vsub.f32 %v853, %v1015
        %v1040 = vsub.f32 %v923, %v1016
        %v1041 = vsub.f32 %v924, %v1017
        %v1042 = vsub.f32 %v925, %v1018
        %v1043 = vsub.f32 %v926, %v1019
        %v1044 = vsub.f32 %v927, %v1020
        %v1045 = vsub.f32 %v928, %v1021
        %v1046 = vsub.f32 %v929, %v1022
        %v1047 = vsub.f32 %v930, %v1023
        %v1048 = vsub.f32 %v1000, %v1024
        %v1049 = vsub.f32 %v1001, %v1025
        %v1050 = vsub.f32 %v1002, %v1026
        %v1051 = vsub.f32 %v1003, %v1027
        %v1052 = vsub.f32 %v1004, %v1028
        %v1053 = vsub.f32 %v1005, %v1029
        %v1054 = vsub.f32 %v1006, %v1030
        %v1055 = vsub.f32 %v1007, %v1031
        %v1056 = vmul.f32 %v1024, 2.0
        %v1057 = vmul.f32 %v1025, 2.0
        %v1058 = vmul.f32 %v1026, 2.0
        %v1059 = vmul.f32 %v1027, 2.0
        %v1060 = vmul.f32 %v1028, 2.0
        %v1061 = vmul.f32 %v1029, 2.0
        %v1062 = vmul.f32 %v1030, 2.0
        %v1063 = vmul.f32 %v1031, 2.0
        %v1064 = vadd.f32 %v1056, 0.0001
        %v1065 = vadd.f32 %v1057, 0.0001
        %v1066 = vadd.f32 %v1058, 0.0001
        %v1067 = vadd.f32 %v1059, 0.0001
        %v1068 = vadd.f32 %v1060, 0.0001
        %v1069 = vadd.f32 %v1061, 0.0001
        %v1070 = vadd.f32 %v1062, 0.0001
        %v1071 = vadd.f32 %v1063, 0.0001
        %v1072 = vmul.f32 %v1048, 2.0
        %v1073 = vmul.f32 %v1049, 2.0
        %v1074 = vmul.f32 %v1050, 2.0
        %v1075 = vmul.f32 %v1051, 2.0
        %v1076 = vmul.f32 %v1052, 2.0
        %v1077 = vmul.f32 %v1053, 2.0
        %v1078 = vmul.f32 %v1054, 2.0
        %v1079 = vmul.f32 %v1055, 2.0
        %v1080 = vadd.f32 %v1072, 0.0009
        %v1081 = vadd.f32 %v1073, 0.0009
        %v1082 = vadd.f32 %v1074, 0.0009
        %v1083 = vadd.f32 %v1075, 0.0009
        %v1084 = vadd.f32 %v1076, 0.0009
        %v1085 = vadd.f32 %v1077, 0.0009
        %v1086 = vadd.f32 %v1078, 0.0009
        %v1087 = vadd.f32 %v1079, 0.0009
        %v1088 = vmul.f32 %v1064, %v1080
        %v1089 = vmul.f32 %v1065, %v1081
        %v1090 = vmul.f32 %v1066, %v1082
        %v1091 = vmul.f32 %v1067, %v1083
        %v1092 = vmul.f32 %v1068, %v1084
        %v1093 = vmul.f32 %v1069, %v1085
        %v1094 = vmul.f32 %v1070, %v1086
        %v1095 = vmul.f32 %v1071, %v1087
        %v1096 = vadd.f32 %v1008, %v1016
        %v1097 = vadd.f32 %v1009, %v1017
        %v1098 = vadd.f32 %v1010, %v1018
        %v1099 = vadd.f32 %v1011, %v1019
        %v1100 = vadd.f32 %v1012, %v1020
        %v1101 = vadd.f32 %v1013, %v1021
        %v1102 = vadd.f32 %v1014, %v1022
        %v1103 = vadd.f32 %v1015, %v1023
        %v1104 = vadd.f32 %v1096, 0.0001
        %v1105 = vadd.f32 %v1097, 0.0001
        %v1106 = vadd.f32 %v1098, 0.0001
        %v1107 = vadd.f32 %v1099, 0.0001
        %v1108 = vadd.f32 %v1100, 0.0001
        %v1109 = vadd.f32 %v1101, 0.0001
        %v1110 = vadd.f32 %v1102, 0.0001
        %v1111 = vadd.f32 %v1103, 0.0001
        %v1112 = vadd.f32 %v1032, %v1040
        %v1113 = vadd.f32 %v1033, %v1041
        %v1114 = vadd.f32 %v1034, %v1042
        %v1115 = vadd.f32 %v1035, %v1043
        %v1116 = vadd.f32 %v1036, %v1044
        %v1117 = vadd.f32 %v1037, %v1045
        %v1118 = vadd.f32 %v1038, %v1046
        %v1119 = vadd.f32 %v1039, %v1047
        %v1120 = vadd.f32 %v1112, 0.0009
        %v1121 = vadd.f32 %v1113, 0.0009
        %v1122 = vadd.f32 %v1114, 0.0009
        %v1123 = vadd.f32 %v1115, 0.0009
        %v1124 = vadd.f32 %v1116, 0.0009
        %v1125 = vadd.f32 %v1117, 0.0009
        %v1126 = vadd.f32 %v1118, 0.0009
        %v1127 = vadd.f32 %v1119, 0.0009
        %v1128 = vmul.f32 %v1104, %v1120
        %v1129 = vmul.f32 %v1105, %v1121
        %v1130 = vmul.f32 %v1106, %v1122
        %v1131 = vmul.f32 %v1107, %v1123
        %v1132 = vmul.f32 %v1108, %v1124
        %v1133 = vmul.f32 %v1109, %v1125
        %v1134 = vmul.f32 %v1110, %v1126
        %v1135 = vmul.f32 %v1111, %v1127
        %v1136 = vrcp.pop %v1128
        %v1137 = vmul.f32 %v1088, %v1136
        %v1138 = vrcp.pop %v1129
        %v1139 = vmul.f32 %v1089, %v1138
        %v1140 = vrcp.pop %v1130
        %v1141 = vmul.f32 %v1090, %v1140
        %v1142 = vrcp.pop %v1131
        %v1143 = vmul.f32 %v1091, %v1142
        %v1144 = vrcp.pop %v1132
        %v1145 = vmul.f32 %v1092, %v1144
        %v1146 = vrcp.pop %v1133
        %v1147 = vmul.f32 %v1093, %v1146
        %v1148 = vrcp.pop %v1134
        %v1149 = vmul.f32 %v1094, %v1148
        %v1150 = vrcp.pop %v1135
        %v1151 = vmul.f32 %v1095, %v1150
        %v1152 = vsub.f32 1.0, %v1137
        %v1153 = vsub.f32 1.0, %v1139
        %v1154 = vsub.f32 1.0, %v1141
        %v1155 = vsub.f32 1.0, %v1143
        %v1156 = vsub.f32 1.0, %v1145
        %v1157 = vsub.f32 1.0, %v1147
        %v1158 = vsub.f32 1.0, %v1149
        %v1159 = vsub.f32 1.0, %v1151
        %v1160 = vsel %vm336, %v1152, 0.0
        %v1161 = vsel %vm336, %v1153, 0.0
        %v1162 = vadd.f32 %v1160, %v1161
        %v1163 = vsel %vm336, %v1154, 0.0
        %v1164 = vadd.f32 %v1162, %v1163
        %v1165 = vsel %vm336, %v1155, 0.0
        %v1166 = vadd.f32 %v1164, %v1165
        %v1167 = vsel %vm336, %v1156, 0.0
        %v1168 = vadd.f32 %v1166, %v1167
        %v1169 = vsel %vm336, %v1157, 0.0
        %v1170 = vadd.f32 %v1168, %v1169
        %v1171 = vsel %vm336, %v1158, 0.0
        %v1172 = vadd.f32 %v1170, %v1171
        %v1173 = vsel %vm336, %v1159, 0.0
        %v1174 = vadd.f32 %v1172, %v1173
        %1175 = vst.msk [vmem:[%s232] sm:$0xff] %vm336, %v1174
        %s1176 = sand.u32 %s142, 1
        %s1177 = scalar_lea.sflag [#allocation3], %s1176
        %s1178 = sand.u32 %s142, 1
        %s1179 = smul.addr %s1178, 8
        %s1180 = scalar_lea.vmem [#allocation2], %s1179
        // Predicated region
        $region41: #{tpu_custom_call.1} parent=39 // pred_check
          %p1181 = pneg %p152
        $region42: #{tpu_custom_call.1} parent=39 // pred_check_branch
          %1183 = sbr.rel (%p1181) target = $region44
        $region43: #{tpu_custom_call.1} parent=39 // pred_region
          %s1185 = ssub.s32 128, 128
          %1186 = vsyncadd %s1177, %s1185
          %s1187 = smul.addr %s19, 128
          %s1188 = scalar_lea.hbm %s5, %s1187
          %s1190 = sshll.u32 %s1180, 4
          %s1191 = int_to_ptr.vmem [resolvable:$true] %s1190
          %1193 = dma.vmem_to_hbm [thread:$0]  %s1191, 128, %s1188, %s1177
        $region44: #{tpu_custom_call.1} parent=39 // pred_fallthru
          _
      $region40: #{tpu_custom_call.1} parent=5 // pred_fallthru
        _
      %p1194 = scmp.le.s32.totalorder 2, %s14
      // Predicated region
      $region45: #{tpu_custom_call.1} parent=5 // pred_check
        %p1195 = pneg %p1194
      $region46: #{tpu_custom_call.1} parent=5 // pred_check_branch
        %1197 = sbr.rel (%p1195) target = $region48
      $region47: #{tpu_custom_call.1} parent=5 // pred_region
        %s1198 = ssub.s32 %s14, 2
        // Predicated region
        $region49: #{tpu_custom_call.1} parent=47 // pred_check
          %p1199 = pneg %p158
        $region50: #{tpu_custom_call.1} parent=47 // pred_check_branch
          %1201 = sbr.rel (%p1199) target = $region52
        $region51: #{tpu_custom_call.1} parent=47 // pred_region
          %s1202 = sand.u32 %s143, 1
          %s1203 = scalar_lea.sflag [#allocation3], %s1202
          %s1204 = sand.u32 %s143, 1
          %s1205 = smul.addr %s1204, 8
          %s1206 = scalar_lea.vmem [#allocation2], %s1205
          %1207 = dma.done %s1203, 128
        $region52: #{tpu_custom_call.1} parent=47 // pred_fallthru
          _
      $region48: #{tpu_custom_call.1} parent=5 // pred_fallthru
        _
    $region6: #{tpu_custom_call.1} parent=1 // loop_footer
      %s18 = sadd.s32 1, %s14
    $region7: #{tpu_custom_call.1} parent=1 // loop_footer_branch
      %13 = sbr.rel target = $region3
    $region8: #{tpu_custom_call.1} parent=1 // loop_exit
      _
    %1208 = vsyncpa [#allocation3], 1
    %s1209 = scalar_lea.sflag [#allocation3], 1
    %1210 = vsyncpa %s1209, 1

</llo_original>
